<compile_context>
chip_gen: v7x
topology: tpu7x:2x2x1
jax: 0.10.0
libtpu: 0.0.40
codegen_flags: <defaults>
</compile_context>

<pallas_src>
import functools

import numpy as np
import jax
import jax.numpy as jnp
from jax import lax
from jax.experimental import pallas as pl
from jax.experimental.pallas import tpu as pltpu


# ---------------------------------------------------------------------------
# Kernel: fused 3x3 conv (stride 1, pad 1, no bias) + PixelUnshuffle(2),
# expressed as a 2x2 stride-1 VALID conv over the space-to-depth'd input.
# ---------------------------------------------------------------------------
def _down_kernel(xm_ref, xh_ref, w_ref, o_ref, xcat_ref):
    # xm_ref  : (1, TH, Ws, C4)      main row tile of the space-to-depth input
    # xh_ref  : (1, 1,  Ws, C4)      one-row halo (row TH of the same window)
    # w_ref   : (2, 2*C4, Co)        fused weight: [dh=0 ; dh=1], K = [dw=0;dw=1]
    # o_ref   : (1, TH, Wo, Co)      output tile (NHWC, Co = 4*Cout)
    # xcat_ref: (TH+1, Wo, 2*C4)     W-direction im2col scratch (compute dtype)
    th = xm_ref.shape[1]
    ws = xm_ref.shape[2]
    c4 = xm_ref.shape[3]
    wo = o_ref.shape[2]
    co = o_ref.shape[3]

    # Build the W-direction im2col once per tile (the only explicit copy):
    #   xcat[r, w, 0:C4]    = X[r, w]       (dw = 0 tap)
    #   xcat[r, w, C4:2C4]  = X[r, w + 1]   (dw = 1 tap)
    # for window rows r = 0..TH (row TH is supplied by the 1-row halo block).
    # The shifted operands are read straight from the refs so Mosaic folds the
    # offsets into the loads (no value-slice copies).
    xcat_ref[0:th, :, 0:c4]      = xm_ref[0, :, 0:wo, :]
    xcat_ref[0:th, :, c4:2 * c4] = xm_ref[0, :, 1:ws, :]
    xcat_ref[th, :, 0:c4]        = xh_ref[0, 0, 0:wo, :]
    xcat_ref[th, :, c4:2 * c4]   = xh_ref[0, 0, 1:ws, :]

    # dh = 0 rows (0..TH-1) and dh = 1 rows (1..TH) are pure row-address
    # offsets into the same scratch: two fat K = 2*C4 matmuls, f32 accumulation
    # (no zeros init, single merge add).
    top = xcat_ref[0:th].reshape(th * wo, 2 * c4)
    bot = xcat_ref[1:th + 1].reshape(th * wo, 2 * c4)
    acc = jnp.dot(top, w_ref[0], preferred_element_type=jnp.float32)
    acc = acc + jnp.dot(bot, w_ref[1], preferred_element_type=jnp.float32)
    o_ref[0] = acc.reshape(th, wo, co).astype(o_ref.dtype)


# ---------------------------------------------------------------------------
# Host-side (wrapper) layout helpers — plain JAX, fused by XLA under jit.
# ---------------------------------------------------------------------------
def _fused_weight(w_oihw, dtype):
    """Refold the (Cout, Cin, 3, 3) conv weight into the 2x2-conv-over-
    space-to-depth form: (4 taps, 4*Cin, 4*Cout).  Output channels are ordered
    exactly like PixelUnshuffle(2) on the conv output: oc = c*4 + i*2 + j."""
    cout, cin = w_oihw.shape[0], w_oihw.shape[1]
    w_hwio = jnp.transpose(w_oihw, (2, 3, 1, 0))           # (3, 3, Cin, Cout)
    # w5[A, B, cin, c, i, j] = w_hwio[A - i, B - j, cin, c]  (0 elsewhere),
    # where (A, B) indexes the 4x4 stride-2 receptive field and (i, j) the
    # PixelUnshuffle phase.
    w5 = jnp.zeros((4, 4, cin, cout, 2, 2), w_hwio.dtype)
    for i in range(2):
        for j in range(2):
            for a in range(4):
                for b in range(4):
                    kh, kw = a - i, b - j
                    if 0 <= kh <= 2 and 0 <= kw <= 2:
                        w5 = w5.at[a, b, :, :, i, j].set(w_hwio[kh, kw])
    # Split A -> (a1, a0), B -> (b1, b0): a1/b1 pick the 2x2 conv tap (dh, dw),
    # a0/b0 pick the space-to-depth phase inside the input channels.
    w5 = w5.reshape(2, 2, 2, 2, cin, cout, 2, 2)       # (a1,a0,b1,b0,ci,c,i,j)
    w5 = jnp.transpose(w5, (0, 2, 1, 3, 4, 5, 6, 7))   # (a1,b1,a0,b0,ci,c,i,j)
    return w5.reshape(4, 4 * cin, 4 * cout).astype(dtype)


def _fused_weight_2tap(w_oihw, dtype):
    """(Cout, Cin, 3, 3) -> (2, 2*4*Cin, 4*Cout): row 0 = dh=0 taps with
    K = [dw=0 ; dw=1], row 1 = dh=1 taps.  Matches the in-kernel im2col."""
    w4 = _fused_weight(w_oihw, dtype)                      # tap g = 2*dh + dw
    w_top = jnp.concatenate([w4[0], w4[1]], axis=0)        # dh = 0
    w_bot = jnp.concatenate([w4[2], w4[3]], axis=0)        # dh = 1
    return jnp.stack([w_top, w_bot], axis=0)               # (2, 2*C4, Co)


def _space_to_depth_pad(x_nchw, dtype, extra_rows=0):
    """NCHW -> padded NHWC -> space-to-depth(2).  Channel layout of the result
    is (a0*2 + b0)*Cin + cin, i.e. value x_pad[n, 2h'+a0, 2w'+b0, cin].
    `extra_rows` pads additional zero output-rows so that any row-tile count
    divides the padded height (remainder-tile handling)."""
    n, cin, h, w = x_nchw.shape
    x = jnp.transpose(x_nchw, (0, 2, 3, 1)).astype(dtype)   # NHWC, compute dt
    x = jnp.pad(x, ((0, 0), (1, 1 + 2 * extra_rows), (1, 1), (0, 0)))
    hs = (h + 2) // 2 + extra_rows
    ws = (w + 2) // 2
    x = x.reshape(n, hs, 2, ws, 2, cin)
    x = jnp.transpose(x, (0, 1, 3, 2, 4, 5))
    return x.reshape(n, hs, ws, 4 * cin)


def _vmem_budget_bytes():
    """Per-generation VMEM sizing: (tile-cost budget, scoped vmem limit).
    v5e/v6e: 128 MiB physical VMEM -> big row tiles; v7x: 64 MiB per core ->
    conservative.  ~30% headroom is left for compiler scratch / spills."""
    fallback = 64 * 1024 * 1024                 # v7x-conservative default
    try:
        vmem = int(pltpu.get_tpu_info().vmem_capacity_bytes)
    except Exception:
        vmem = fallback
    if vmem <= 0:
        vmem = fallback
    return int(0.5 * vmem), int(0.7 * vmem)


def _pick_row_tile(ho, wo, ws, c4, co, n_batch, act_bytes, out_bytes, budget):
    """Largest row tile TH whose per-step VMEM footprint fits `budget`, while
    keeping at least ~4 grid steps total (pipelining / megacore).  TH need not
    divide ho: the wrapper pads the remainder tile."""
    def cost(t):
        in_main = 2 * t * ws * c4 * act_bytes            # double-buffered input
        in_halo = 2 * ws * c4 * act_bytes                # double-buffered halo
        out_blk = 2 * t * wo * co * out_bytes            # double-buffered output
        wgt     = 2 * 2 * (2 * c4) * co * act_bytes      # fused weight, dbl-buf
        xcat    = (t + 1) * wo * (2 * c4) * act_bytes    # im2col scratch
        accs    = 2 * t * wo * co * 4                    # f32 matmul results
        return in_main + in_halo + out_blk + wgt + xcat + accs

    min_steps = -(-4 // max(n_batch, 1))                 # ceil(4 / N)
    t_cap = min(max(1, -(-ho // min_steps)), ho, 512)
    best = 1
    for t in range(1, t_cap + 1):
        if cost(t) <= budget:
            best = t
    # Rebalance so the padded remainder row-tile is not wastefully small.
    n_tiles = -(-ho // best)
    return -(-ho // n_tiles)


# ---------------------------------------------------------------------------
# Public forward (NCHW in / NCHW out by default, matching the PyTorch module).
# ---------------------------------------------------------------------------
@functools.partial(jax.jit,
                   static_argnames=("tile_h", "compute_dtype", "nhwc_output"))
def down_forward(x_nchw, w_oihw, *, tile_h=None, compute_dtype=jnp.bfloat16,
                 nhwc_output=False):
    """`Down` forward: Conv2d(feat, feat//2, 3, 1, 1, bias=False) then
    PixelUnshuffle(2).  x: (N, feat, H, W), w: (feat//2, feat, 3, 3).
    Returns (N, 2*feat, H//2, W//2) in the input dtype (or NHWC if
    nhwc_output=True, which skips the epilog transpose pass).
    NOTE: compute is bf16 with f32 accumulation by default (documented
    deviation from the f32 PyTorch module)."""
    n, cin, h, w = x_nchw.shape
    cout = w_oihw.shape[0]
    assert w_oihw.shape == (cout, cin, 3, 3), w_oihw.shape
    assert h % 2 == 0 and w % 2 == 0, "PixelUnshuffle(2) requires even H, W"
    ho, wo = h // 2, w // 2
    ws = wo + 1
    c4, co = 4 * cin, 4 * cout

    budget, vmem_limit = _vmem_budget_bytes()
    act_b = np.dtype(compute_dtype).itemsize
    out_b = np.dtype(x_nchw.dtype).itemsize

    th = tile_h if tile_h is not None else _pick_row_tile(
        ho, wo, ws, c4, co, n, act_b, out_b, budget)
    th = max(1, min(int(th), ho))
    n_tiles = -(-ho // th)
    ho_pad = n_tiles * th                      # remainder tile handled by pad

    xs = _space_to_depth_pad(x_nchw, compute_dtype,
                             extra_rows=ho_pad - ho)    # (N, ho_pad+1, Ws, C4)
    wk = _fused_weight_2tap(w_oihw, compute_dtype)      # (2, 2*C4, Co)

    y = pl.pallas_call(
        _down_kernel,
        out_shape=jax.ShapeDtypeStruct((n, ho_pad, wo, co), x_nchw.dtype),
        grid_spec=pltpu.PrefetchScalarGridSpec(
            num_scalar_prefetch=0,
            grid=(n, n_tiles),
            in_specs=[
                # main row tile: output rows [b*TH, (b+1)*TH)
                pl.BlockSpec((1, th, ws, c4), lambda ni, b: (ni, b, 0, 0)),
                # 1-row halo: row (b+1)*TH of the same array (block size 1 on
                # that dim -> block index == row index); always in bounds since
                # the padded space-to-depth input has ho_pad + 1 rows.
                pl.BlockSpec((1, 1, ws, c4),
                             lambda ni, b: (ni, (b + 1) * th, 0, 0)),
                # fused weight, resident across the whole grid
                pl.BlockSpec((2, 2 * c4, co), lambda ni, b: (0, 0, 0)),
            ],
            out_specs=pl.BlockSpec((1, th, wo, co),
                                   lambda ni, b: (ni, b, 0, 0)),
            scratch_shapes=[pltpu.VMEM((th + 1, wo, 2 * c4), compute_dtype)],
        ),
        compiler_params=pltpu.CompilerParams(
            dimension_semantics=("parallel", "parallel"),
            vmem_limit_bytes=vmem_limit),
    )(xs, xs, wk)

    if ho_pad != ho:
        y = y[:, :ho]                           # fuses with the epilog below
    if nhwc_output:
        return y
    return jnp.transpose(y, (0, 3, 1, 2))       # NHWC -> NCHW


# ---------------------------------------------------------------------------
# Pure-JAX reference (f32 conv + PixelUnshuffle) for the self-check.
# ---------------------------------------------------------------------------
def _pixel_unshuffle(x_nchw, r=2):
    n, c, h, w = x_nchw.shape
    x = x_nchw.reshape(n, c, h // r, r, w // r, r)
    x = jnp.transpose(x, (0, 1, 3, 5, 2, 4))
    return x.reshape(n, c * r * r, h // r, w // r)


def down_reference(x_nchw, w_oihw):
    y = lax.conv_general_dilated(
        x_nchw, w_oihw, window_strides=(1, 1), padding=((1, 1), (1, 1)),
        dimension_numbers=("NCHW", "OIHW", "NCHW"))
    return _pixel_unshuffle(y, 2)


if __name__ == "__main__":
    key = jax.random.PRNGKey(0)
    kx, kw, kx2 = jax.random.split(key, 3)

    feat = 8                          # small analogue of the default feat=64
    wgt = 0.1 * jax.random.normal(kw, (feat // 2, feat, 3, 3),
                                  dtype=jnp.float32)

    # Case 1: batch 2, 16x16 — tile picker chooses TH (2 row tiles per image,
    # exercising the halo path).
    n, h, w = 2, 16, 16
    x = jax.random.normal(kx, (n, feat, h, w), dtype=jnp.float32)
    out = jax.block_until_ready(down_forward(x, wgt))
    ref = jax.block_until_ready(down_reference(x, wgt))
    assert out.shape == (n, 2 * feat, h // 2, w // 2), out.shape
    # bf16 inputs + f32 accumulation vs. pure-f32 reference.
    assert jnp.allclose(out, ref, atol=5e-2, rtol=5e-2), float(
        jnp.max(jnp.abs(out - ref)))

    # Case 2: non-divisible row count (ho=10 with tile_h=4 -> padded remainder
    # tile), batch 1.
    h2 = 20
    x2 = jax.random.normal(kx2, (1, feat, h2, w), dtype=jnp.float32)
    out2 = jax.block_until_ready(down_forward(x2, wgt, tile_h=4))
    ref2 = jax.block_until_ready(down_reference(x2, wgt))
    assert out2.shape == (1, 2 * feat, h2 // 2, w // 2), out2.shape
    assert jnp.allclose(out2, ref2, atol=5e-2, rtol=5e-2), float(
        jnp.max(jnp.abs(out2 - ref2)))

    print("KERNEL_OK")
</pallas_src>

<mosaic_0001>
module attributes {stable_mosaic.version = 11 : i64} {
  func.func @_down_kernel(%arg0: i32, %arg1: i32, %arg2: memref<1x4x9x32xbf16, #tpu.memory_space<vmem>>, %arg3: memref<1x1x9x32xbf16, #tpu.memory_space<vmem>>, %arg4: memref<2x64x16xbf16, #tpu.memory_space<vmem>>, %arg5: memref<1x4x8x16xf32, #tpu.memory_space<vmem>>, %arg6: memref<5x8x64xbf16, #tpu.memory_space<vmem>>) attributes {dimension_semantics = [#tpu.dimension_semantics<parallel>, #tpu.dimension_semantics<parallel>], iteration_bounds = array<i64: 2, 2>, scalar_prefetch = 0 : i64, scratch_operands = 1 : i64, tpu.core_type = #tpu.core_type<tc>, window_params = [{transform_indices = @transform_0, window_bounds = array<i64: 1, 4, 9, 32>}, {transform_indices = @transform_1, window_bounds = array<i64: 1, 1, 9, 32>}, {pipeline_mode = #tpu.pipeline_mode<synchronous>, transform_indices = @transform_2, window_bounds = array<i64: 2, 64, 16>}, {transform_indices = @transform_3, window_bounds = array<i64: 1, 4, 8, 16>}]} {
    %c0 = arith.constant 0 : index
    %c0_0 = arith.constant 0 : index
    %c0_1 = arith.constant 0 : index
    %c0_2 = arith.constant 0 : index
    %0 = vector.load %arg2[%c0, %c0_0, %c0_1, %c0_2] : memref<1x4x9x32xbf16, #tpu.memory_space<vmem>>, vector<1x4x8x32xbf16>
    %1 = vector.shape_cast %0 : vector<1x4x8x32xbf16> to vector<4x8x32xbf16>
    %c0_3 = arith.constant 0 : index
    %c0_4 = arith.constant 0 : index
    %c0_5 = arith.constant 0 : index
    %2 = vector.load %arg6[%c0_3, %c0_4, %c0_5] : memref<5x8x64xbf16, #tpu.memory_space<vmem>>, vector<4x8x32xbf16>
    tpu.vector_store %arg6[%c0_3, %c0_4, %c0_5], %1 {strides = array<i32>} : memref<5x8x64xbf16, #tpu.memory_space<vmem>>, vector<4x8x32xbf16>,
    %c0_6 = arith.constant 0 : index
    %c0_7 = arith.constant 0 : index
    %c1 = arith.constant 1 : index
    %c0_8 = arith.constant 0 : index
    %3 = vector.load %arg2[%c0_6, %c0_7, %c1, %c0_8] : memref<1x4x9x32xbf16, #tpu.memory_space<vmem>>, vector<1x4x8x32xbf16>
    %4 = vector.shape_cast %3 : vector<1x4x8x32xbf16> to vector<4x8x32xbf16>
    %c0_9 = arith.constant 0 : index
    %c0_10 = arith.constant 0 : index
    %c32 = arith.constant 32 : index
    %5 = vector.load %arg6[%c0_9, %c0_10, %c32] : memref<5x8x64xbf16, #tpu.memory_space<vmem>>, vector<4x8x32xbf16>
    tpu.vector_store %arg6[%c0_9, %c0_10, %c32], %4 {strides = array<i32>} : memref<5x8x64xbf16, #tpu.memory_space<vmem>>, vector<4x8x32xbf16>,
    %c0_11 = arith.constant 0 : index
    %c0_12 = arith.constant 0 : index
    %c0_13 = arith.constant 0 : index
    %c0_14 = arith.constant 0 : index
    %6 = vector.load %arg3[%c0_11, %c0_12, %c0_13, %c0_14] : memref<1x1x9x32xbf16, #tpu.memory_space<vmem>>, vector<1x1x8x32xbf16>
    %7 = vector.shape_cast %6 : vector<1x1x8x32xbf16> to vector<8x32xbf16>
    %c4 = arith.constant 4 : index
    %c0_15 = arith.constant 0 : index
    %c0_16 = arith.constant 0 : index
    %8 = vector.load %arg6[%c4, %c0_15, %c0_16] : memref<5x8x64xbf16, #tpu.memory_space<vmem>>, vector<1x8x32xbf16>
    %9 = vector.shape_cast %8 : vector<1x8x32xbf16> to vector<8x32xbf16>
    %10 = vector.shape_cast %7 : vector<8x32xbf16> to vector<1x8x32xbf16>
    tpu.vector_store %arg6[%c4, %c0_15, %c0_16], %10 {strides = array<i32>} : memref<5x8x64xbf16, #tpu.memory_space<vmem>>, vector<1x8x32xbf16>,
    %c0_17 = arith.constant 0 : index
    %c0_18 = arith.constant 0 : index
    %c1_19 = arith.constant 1 : index
    %c0_20 = arith.constant 0 : index
    %11 = vector.load %arg3[%c0_17, %c0_18, %c1_19, %c0_20] : memref<1x1x9x32xbf16, #tpu.memory_space<vmem>>, vector<1x1x8x32xbf16>
    %12 = vector.shape_cast %11 : vector<1x1x8x32xbf16> to vector<8x32xbf16>
    %c4_21 = arith.constant 4 : index
    %c0_22 = arith.constant 0 : index
    %c32_23 = arith.constant 32 : index
    %13 = vector.load %arg6[%c4_21, %c0_22, %c32_23] : memref<5x8x64xbf16, #tpu.memory_space<vmem>>, vector<1x8x32xbf16>
    %14 = vector.shape_cast %13 : vector<1x8x32xbf16> to vector<8x32xbf16>
    %15 = vector.shape_cast %12 : vector<8x32xbf16> to vector<1x8x32xbf16>
    tpu.vector_store %arg6[%c4_21, %c0_22, %c32_23], %15 {strides = array<i32>} : memref<5x8x64xbf16, #tpu.memory_space<vmem>>, vector<1x8x32xbf16>,
    %c0_24 = arith.constant 0 : index
    %c0_25 = arith.constant 0 : index
    %c0_26 = arith.constant 0 : index
    %16 = vector.load %arg6[%c0_24, %c0_25, %c0_26] : memref<5x8x64xbf16, #tpu.memory_space<vmem>>, vector<4x8x64xbf16>
    %17 = vector.shape_cast %16 : vector<4x8x64xbf16> to vector<32x64xbf16>
    %c1_27 = arith.constant 1 : index
    %c0_28 = arith.constant 0 : index
    %c0_29 = arith.constant 0 : index
    %18 = vector.load %arg6[%c1_27, %c0_28, %c0_29] : memref<5x8x64xbf16, #tpu.memory_space<vmem>>, vector<4x8x64xbf16>
    %19 = vector.shape_cast %18 : vector<4x8x64xbf16> to vector<32x64xbf16>
    %c0_30 = arith.constant 0 : index
    %c0_31 = arith.constant 0 : index
    %c0_32 = arith.constant 0 : index
    %20 = vector.load %arg4[%c0_30, %c0_31, %c0_32] : memref<2x64x16xbf16, #tpu.memory_space<vmem>>, vector<1x64x16xbf16>
    %21 = vector.shape_cast %20 : vector<1x64x16xbf16> to vector<64x16xbf16>
    %cst = arith.constant dense<0.000000e+00> : vector<32x16xf32>
    %22 = tpu.matmul %17, %21, %cst {dimension_numbers = #tpu.dot_dimension_numbers<[1], [0], [0], [1], [0, 0, 1, 1], [], []>} : vector<32x64xbf16>, vector<64x16xbf16>, vector<32x16xf32> -> vector<32x16xf32>
    %c1_33 = arith.constant 1 : index
    %c0_34 = arith.constant 0 : index
    %c0_35 = arith.constant 0 : index
    %23 = vector.load %arg4[%c1_33, %c0_34, %c0_35] : memref<2x64x16xbf16, #tpu.memory_space<vmem>>, vector<1x64x16xbf16>
    %24 = vector.shape_cast %23 : vector<1x64x16xbf16> to vector<64x16xbf16>
    %cst_36 = arith.constant dense<0.000000e+00> : vector<32x16xf32>
    %25 = tpu.matmul %19, %24, %cst_36 {dimension_numbers = #tpu.dot_dimension_numbers<[1], [0], [0], [1], [0, 0, 1, 1], [], []>} : vector<32x64xbf16>, vector<64x16xbf16>, vector<32x16xf32> -> vector<32x16xf32>
    %26 = arith.addf %22, %25 : vector<32x16xf32>
    %27 = vector.shape_cast %26 : vector<32x16xf32> to vector<4x8x16xf32>
    %c0_37 = arith.constant 0 : index
    %c0_38 = arith.constant 0 : index
    %c0_39 = arith.constant 0 : index
    %c0_40 = arith.constant 0 : index
    %28 = vector.load %arg5[%c0_37, %c0_38, %c0_39, %c0_40] : memref<1x4x8x16xf32, #tpu.memory_space<vmem>>, vector<1x4x8x16xf32>
    %29 = vector.shape_cast %28 : vector<1x4x8x16xf32> to vector<4x8x16xf32>
    %30 = vector.shape_cast %27 : vector<4x8x16xf32> to vector<1x4x8x16xf32>
    tpu.vector_store %arg5[%c0_37, %c0_38, %c0_39, %c0_40], %30 {strides = array<i32>} : memref<1x4x8x16xf32, #tpu.memory_space<vmem>>, vector<1x4x8x16xf32>,
    return
  }
  func.func @transform_0(%arg0: i32, %arg1: i32) -> (i32, i32, i32, i32) {
    %c0_i32 = arith.constant 0 : i32
    %c0_i32_0 = arith.constant 0 : i32
    %c0_i32_1 = arith.constant 0 : i32
    return %arg0, %arg1, %c0_i32, %c0_i32_0 : i32, i32, i32, i32
  }
  func.func @transform_1(%arg0: i32, %arg1: i32) -> (i32, i32, i32, i32) {
    %c1_i32 = arith.constant 1 : i32
    %0 = arith.addi %arg1, %c1_i32 : i32
    %c4_i32 = arith.constant 4 : i32
    %1 = arith.muli %0, %c4_i32 : i32
    %c0_i32 = arith.constant 0 : i32
    %c0_i32_0 = arith.constant 0 : i32
    %c0_i32_1 = arith.constant 0 : i32
    return %arg0, %1, %c0_i32, %c0_i32_0 : i32, i32, i32, i32
  }
  func.func @transform_2(%arg0: i32, %arg1: i32) -> (i32, i32, i32) {
    %c0_i32 = arith.constant 0 : i32
    %c0_i32_0 = arith.constant 0 : i32
    %c0_i32_1 = arith.constant 0 : i32
    %c0_i32_2 = arith.constant 0 : i32
    return %c0_i32, %c0_i32_0, %c0_i32_1 : i32, i32, i32
  }
  func.func @transform_3(%arg0: i32, %arg1: i32) -> (i32, i32, i32, i32) {
    %c0_i32 = arith.constant 0 : i32
    %c0_i32_0 = arith.constant 0 : i32
    %c0_i32_1 = arith.constant 0 : i32
    return %arg0, %arg1, %c0_i32, %c0_i32_0 : i32, i32, i32, i32
  }
}

</mosaic_0001>

<llo_original>
// kernel: squeeze.76
$region0: #{squeeze.76}
  %s0 = inlined_call_operand.vmem [shape: bf16[1,1,2,2,8,4,2,2], index: 0, kind: input, shape index: {}]
  %s1 = inlined_call_operand.vmem [shape: bf16[32,16], index: 1, kind: output, shape index: {}]
  $region1: #{squeeze.76} parent=0
    #allocation0 [shape = 'u8[8192]{0}', space=vmem, size = 0x2000, scoped, tag = 'scoped mem for output reshape']
    #allocation1 [shape = 'u8[131072]{0}', space=vmem, size = 0x20000, scoped, tag = 'scoped mem for input reshape']
    %s3 = smul.u32 1, 2
    %s4 = sshllo.u32 0, %s3
    %s5 = smul.addr 1, 31
    %s6 = scalar_lea.vmem %s0, %s5
    %s7 = sshrl.u32 %s4, 1
    %s8 = sor.u32 %s4, %s7
    %s9 = sand.u32 %s8, 85
    %s10 = sshrl.u32 %s9, 1
    %s11 = sor.u32 %s9, %s10
    %s12 = sand.u32 51, %s11
    %s13 = sshrl.u32 %s12, 2
    %s14 = sor.u32 %s12, %s13
    %s15 = sand.u32 15, %s14
    %v16 = vld [vmem:[%s6] sm:%s15]
    %v17 = vunpack.c.l.bf16 %v16
    %v18 = vunpack.c.h.bf16 %v16
    %s19 = scalar_lea.vmem [#allocation1], 248
    %20 = vst [vmem:[%s19] sm:%s4] %v17
    %s21 = smul.addr 1, 30
    %s22 = scalar_lea.vmem %s0, %s21
    %s23 = sshrl.u32 %s4, 1
    %s24 = sor.u32 %s4, %s23
    %s25 = sand.u32 %s24, 85
    %s26 = sshrl.u32 %s25, 1
    %s27 = sor.u32 %s25, %s26
    %s28 = sand.u32 51, %s27
    %s29 = sshrl.u32 %s28, 2
    %s30 = sor.u32 %s28, %s29
    %s31 = sand.u32 15, %s30
    %v32 = vld [vmem:[%s22] sm:%s31]
    %v33 = vunpack.c.l.bf16 %v32
    %v34 = vunpack.c.h.bf16 %v32
    %s35 = scalar_lea.vmem [#allocation1], 240
    %36 = vst [vmem:[%s35] sm:%s4] %v33
    %s37 = smul.addr 1, 29
    %s38 = scalar_lea.vmem %s0, %s37
    %s39 = sshrl.u32 %s4, 1
    %s40 = sor.u32 %s4, %s39
    %s41 = sand.u32 %s40, 85
    %s42 = sshrl.u32 %s41, 1
    %s43 = sor.u32 %s41, %s42
    %s44 = sand.u32 51, %s43
    %s45 = sshrl.u32 %s44, 2
    %s46 = sor.u32 %s44, %s45
    %s47 = sand.u32 15, %s46
    %v48 = vld [vmem:[%s38] sm:%s47]
    %v49 = vunpack.c.l.bf16 %v48
    %v50 = vunpack.c.h.bf16 %v48
    %s51 = scalar_lea.vmem [#allocation1], 232
    %52 = vst [vmem:[%s51] sm:%s4] %v49
    %s53 = smul.addr 1, 28
    %s54 = scalar_lea.vmem %s0, %s53
    %s55 = sshrl.u32 %s4, 1
    %s56 = sor.u32 %s4, %s55
    %s57 = sand.u32 %s56, 85
    %s58 = sshrl.u32 %s57, 1
    %s59 = sor.u32 %s57, %s58
    %s60 = sand.u32 51, %s59
    %s61 = sshrl.u32 %s60, 2
    %s62 = sor.u32 %s60, %s61
    %s63 = sand.u32 15, %s62
    %v64 = vld [vmem:[%s54] sm:%s63]
    %v65 = vunpack.c.l.bf16 %v64
    %v66 = vunpack.c.h.bf16 %v64
    %s67 = scalar_lea.vmem [#allocation1], 224
    %68 = vst [vmem:[%s67] sm:%s4] %v65
    %s69 = smul.addr 1, 27
    %s70 = scalar_lea.vmem %s0, %s69
    %s71 = sshrl.u32 %s4, 1
    %s72 = sor.u32 %s4, %s71
    %s73 = sand.u32 %s72, 85
    %s74 = sshrl.u32 %s73, 1
    %s75 = sor.u32 %s73, %s74
    %s76 = sand.u32 51, %s75
    %s77 = sshrl.u32 %s76, 2
    %s78 = sor.u32 %s76, %s77
    %s79 = sand.u32 15, %s78
    %v80 = vld [vmem:[%s70] sm:%s79]
    %v81 = vunpack.c.l.bf16 %v80
    %v82 = vunpack.c.h.bf16 %v80
    %s83 = scalar_lea.vmem [#allocation1], 216
    %84 = vst [vmem:[%s83] sm:%s4] %v81
    %s85 = smul.addr 1, 26
    %s86 = scalar_lea.vmem %s0, %s85
    %s87 = sshrl.u32 %s4, 1
    %s88 = sor.u32 %s4, %s87
    %s89 = sand.u32 %s88, 85
    %s90 = sshrl.u32 %s89, 1
    %s91 = sor.u32 %s89, %s90
    %s92 = sand.u32 51, %s91
    %s93 = sshrl.u32 %s92, 2
    %s94 = sor.u32 %s92, %s93
    %s95 = sand.u32 15, %s94
    %v96 = vld [vmem:[%s86] sm:%s95]
    %v97 = vunpack.c.l.bf16 %v96
    %v98 = vunpack.c.h.bf16 %v96
    %s99 = scalar_lea.vmem [#allocation1], 208
    %100 = vst [vmem:[%s99] sm:%s4] %v97
    %s101 = smul.addr 1, 25
    %s102 = scalar_lea.vmem %s0, %s101
    %s103 = sshrl.u32 %s4, 1
    %s104 = sor.u32 %s4, %s103
    %s105 = sand.u32 %s104, 85
    %s106 = sshrl.u32 %s105, 1
    %s107 = sor.u32 %s105, %s106
    %s108 = sand.u32 51, %s107
    %s109 = sshrl.u32 %s108, 2
    %s110 = sor.u32 %s108, %s109
    %s111 = sand.u32 15, %s110
    %v112 = vld [vmem:[%s102] sm:%s111]
    %v113 = vunpack.c.l.bf16 %v112
    %v114 = vunpack.c.h.bf16 %v112
    %s115 = scalar_lea.vmem [#allocation1], 200
    %116 = vst [vmem:[%s115] sm:%s4] %v113
    %s117 = smul.addr 1, 24
    %s118 = scalar_lea.vmem %s0, %s117
    %s119 = sshrl.u32 %s4, 1
    %s120 = sor.u32 %s4, %s119
    %s121 = sand.u32 %s120, 85
    %s122 = sshrl.u32 %s121, 1
    %s123 = sor.u32 %s121, %s122
    %s124 = sand.u32 51, %s123
    %s125 = sshrl.u32 %s124, 2
    %s126 = sor.u32 %s124, %s125
    %s127 = sand.u32 15, %s126
    %v128 = vld [vmem:[%s118] sm:%s127]
    %v129 = vunpack.c.l.bf16 %v128
    %v130 = vunpack.c.h.bf16 %v128
    %s131 = scalar_lea.vmem [#allocation1], 192
    %132 = vst [vmem:[%s131] sm:%s4] %v129
    %s133 = smul.addr 1, 23
    %s134 = scalar_lea.vmem %s0, %s133
    %s135 = sshrl.u32 %s4, 1
    %s136 = sor.u32 %s4, %s135
    %s137 = sand.u32 %s136, 85
    %s138 = sshrl.u32 %s137, 1
    %s139 = sor.u32 %s137, %s138
    %s140 = sand.u32 51, %s139
    %s141 = sshrl.u32 %s140, 2
    %s142 = sor.u32 %s140, %s141
    %s143 = sand.u32 15, %s142
    %v144 = vld [vmem:[%s134] sm:%s143]
    %v145 = vunpack.c.l.bf16 %v144
    %v146 = vunpack.c.h.bf16 %v144
    %s147 = scalar_lea.vmem [#allocation1], 184
    %148 = vst [vmem:[%s147] sm:%s4] %v145
    %s149 = smul.addr 1, 22
    %s150 = scalar_lea.vmem %s0, %s149
    %s151 = sshrl.u32 %s4, 1
    %s152 = sor.u32 %s4, %s151
    %s153 = sand.u32 %s152, 85
    %s154 = sshrl.u32 %s153, 1
    %s155 = sor.u32 %s153, %s154
    %s156 = sand.u32 51, %s155
    %s157 = sshrl.u32 %s156, 2
    %s158 = sor.u32 %s156, %s157
    %s159 = sand.u32 15, %s158
    %v160 = vld [vmem:[%s150] sm:%s159]
    %v161 = vunpack.c.l.bf16 %v160
    %v162 = vunpack.c.h.bf16 %v160
    %s163 = scalar_lea.vmem [#allocation1], 176
    %164 = vst [vmem:[%s163] sm:%s4] %v161
    %s165 = smul.addr 1, 21
    %s166 = scalar_lea.vmem %s0, %s165
    %s167 = sshrl.u32 %s4, 1
    %s168 = sor.u32 %s4, %s167
    %s169 = sand.u32 %s168, 85
    %s170 = sshrl.u32 %s169, 1
    %s171 = sor.u32 %s169, %s170
    %s172 = sand.u32 51, %s171
    %s173 = sshrl.u32 %s172, 2
    %s174 = sor.u32 %s172, %s173
    %s175 = sand.u32 15, %s174
    %v176 = vld [vmem:[%s166] sm:%s175]
    %v177 = vunpack.c.l.bf16 %v176
    %v178 = vunpack.c.h.bf16 %v176
    %s179 = scalar_lea.vmem [#allocation1], 168
    %180 = vst [vmem:[%s179] sm:%s4] %v177
    %s181 = smul.addr 1, 20
    %s182 = scalar_lea.vmem %s0, %s181
    %s183 = sshrl.u32 %s4, 1
    %s184 = sor.u32 %s4, %s183
    %s185 = sand.u32 %s184, 85
    %s186 = sshrl.u32 %s185, 1
    %s187 = sor.u32 %s185, %s186
    %s188 = sand.u32 51, %s187
    %s189 = sshrl.u32 %s188, 2
    %s190 = sor.u32 %s188, %s189
    %s191 = sand.u32 15, %s190
    %v192 = vld [vmem:[%s182] sm:%s191]
    %v193 = vunpack.c.l.bf16 %v192
    %v194 = vunpack.c.h.bf16 %v192
    %s195 = scalar_lea.vmem [#allocation1], 160
    %196 = vst [vmem:[%s195] sm:%s4] %v193
    %s197 = smul.addr 1, 19
    %s198 = scalar_lea.vmem %s0, %s197
    %s199 = sshrl.u32 %s4, 1
    %s200 = sor.u32 %s4, %s199
    %s201 = sand.u32 %s200, 85
    %s202 = sshrl.u32 %s201, 1
    %s203 = sor.u32 %s201, %s202
    %s204 = sand.u32 51, %s203
    %s205 = sshrl.u32 %s204, 2
    %s206 = sor.u32 %s204, %s205
    %s207 = sand.u32 15, %s206
    %v208 = vld [vmem:[%s198] sm:%s207]
    %v209 = vunpack.c.l.bf16 %v208
    %v210 = vunpack.c.h.bf16 %v208
    %s211 = scalar_lea.vmem [#allocation1], 152
    %212 = vst [vmem:[%s211] sm:%s4] %v209
    %s213 = smul.addr 1, 18
    %s214 = scalar_lea.vmem %s0, %s213
    %s215 = sshrl.u32 %s4, 1
    %s216 = sor.u32 %s4, %s215
    %s217 = sand.u32 %s216, 85
    %s218 = sshrl.u32 %s217, 1
    %s219 = sor.u32 %s217, %s218
    %s220 = sand.u32 51, %s219
    %s221 = sshrl.u32 %s220, 2
    %s222 = sor.u32 %s220, %s221
    %s223 = sand.u32 15, %s222
    %v224 = vld [vmem:[%s214] sm:%s223]
    %v225 = vunpack.c.l.bf16 %v224
    %v226 = vunpack.c.h.bf16 %v224
    %s227 = scalar_lea.vmem [#allocation1], 144
    %228 = vst [vmem:[%s227] sm:%s4] %v225
    %s229 = smul.addr 1, 17
    %s230 = scalar_lea.vmem %s0, %s229
    %s231 = sshrl.u32 %s4, 1
    %s232 = sor.u32 %s4, %s231
    %s233 = sand.u32 %s232, 85
    %s234 = sshrl.u32 %s233, 1
    %s235 = sor.u32 %s233, %s234
    %s236 = sand.u32 51, %s235
    %s237 = sshrl.u32 %s236, 2
    %s238 = sor.u32 %s236, %s237
    %s239 = sand.u32 15, %s238
    %v240 = vld [vmem:[%s230] sm:%s239]
    %v241 = vunpack.c.l.bf16 %v240
    %v242 = vunpack.c.h.bf16 %v240
    %s243 = scalar_lea.vmem [#allocation1], 136
    %244 = vst [vmem:[%s243] sm:%s4] %v241
    %s245 = smul.addr 1, 16
    %s246 = scalar_lea.vmem %s0, %s245
    %s247 = sshrl.u32 %s4, 1
    %s248 = sor.u32 %s4, %s247
    %s249 = sand.u32 %s248, 85
    %s250 = sshrl.u32 %s249, 1
    %s251 = sor.u32 %s249, %s250
    %s252 = sand.u32 51, %s251
    %s253 = sshrl.u32 %s252, 2
    %s254 = sor.u32 %s252, %s253
    %s255 = sand.u32 15, %s254
    %v256 = vld [vmem:[%s246] sm:%s255]
    %v257 = vunpack.c.l.bf16 %v256
    %v258 = vunpack.c.h.bf16 %v256
    %s259 = scalar_lea.vmem [#allocation1], 128
    %260 = vst [vmem:[%s259] sm:%s4] %v257
    %s261 = smul.addr 1, 15
    %s262 = scalar_lea.vmem %s0, %s261
    %s263 = sshrl.u32 %s4, 1
    %s264 = sor.u32 %s4, %s263
    %s265 = sand.u32 %s264, 85
    %s266 = sshrl.u32 %s265, 1
    %s267 = sor.u32 %s265, %s266
    %s268 = sand.u32 51, %s267
    %s269 = sshrl.u32 %s268, 2
    %s270 = sor.u32 %s268, %s269
    %s271 = sand.u32 15, %s270
    %v272 = vld [vmem:[%s262] sm:%s271]
    %v273 = vunpack.c.l.bf16 %v272
    %v274 = vunpack.c.h.bf16 %v272
    %s275 = scalar_lea.vmem [#allocation1], 120
    %276 = vst [vmem:[%s275] sm:%s4] %v273
    %s277 = smul.addr 1, 14
    %s278 = scalar_lea.vmem %s0, %s277
    %s279 = sshrl.u32 %s4, 1
    %s280 = sor.u32 %s4, %s279
    %s281 = sand.u32 %s280, 85
    %s282 = sshrl.u32 %s281, 1
    %s283 = sor.u32 %s281, %s282
    %s284 = sand.u32 51, %s283
    %s285 = sshrl.u32 %s284, 2
    %s286 = sor.u32 %s284, %s285
    %s287 = sand.u32 15, %s286
    %v288 = vld [vmem:[%s278] sm:%s287]
    %v289 = vunpack.c.l.bf16 %v288
    %v290 = vunpack.c.h.bf16 %v288
    %s291 = scalar_lea.vmem [#allocation1], 112
    %292 = vst [vmem:[%s291] sm:%s4] %v289
    %s293 = smul.addr 1, 13
    %s294 = scalar_lea.vmem %s0, %s293
    %s295 = sshrl.u32 %s4, 1
    %s296 = sor.u32 %s4, %s295
    %s297 = sand.u32 %s296, 85
    %s298 = sshrl.u32 %s297, 1
    %s299 = sor.u32 %s297, %s298
    %s300 = sand.u32 51, %s299
    %s301 = sshrl.u32 %s300, 2
    %s302 = sor.u32 %s300, %s301
    %s303 = sand.u32 15, %s302
    %v304 = vld [vmem:[%s294] sm:%s303]
    %v305 = vunpack.c.l.bf16 %v304
    %v306 = vunpack.c.h.bf16 %v304
    %s307 = scalar_lea.vmem [#allocation1], 104
    %308 = vst [vmem:[%s307] sm:%s4] %v305
    %s309 = smul.addr 1, 12
    %s310 = scalar_lea.vmem %s0, %s309
    %s311 = sshrl.u32 %s4, 1
    %s312 = sor.u32 %s4, %s311
    %s313 = sand.u32 %s312, 85
    %s314 = sshrl.u32 %s313, 1
    %s315 = sor.u32 %s313, %s314
    %s316 = sand.u32 51, %s315
    %s317 = sshrl.u32 %s316, 2
    %s318 = sor.u32 %s316, %s317
    %s319 = sand.u32 15, %s318
    %v320 = vld [vmem:[%s310] sm:%s319]
    %v321 = vunpack.c.l.bf16 %v320
    %v322 = vunpack.c.h.bf16 %v320
    %s323 = scalar_lea.vmem [#allocation1], 96
    %324 = vst [vmem:[%s323] sm:%s4] %v321
    %s325 = smul.addr 1, 11
    %s326 = scalar_lea.vmem %s0, %s325
    %s327 = sshrl.u32 %s4, 1
    %s328 = sor.u32 %s4, %s327
    %s329 = sand.u32 %s328, 85
    %s330 = sshrl.u32 %s329, 1
    %s331 = sor.u32 %s329, %s330
    %s332 = sand.u32 51, %s331
    %s333 = sshrl.u32 %s332, 2
    %s334 = sor.u32 %s332, %s333
    %s335 = sand.u32 15, %s334
    %v336 = vld [vmem:[%s326] sm:%s335]
    %v337 = vunpack.c.l.bf16 %v336
    %v338 = vunpack.c.h.bf16 %v336
    %s339 = scalar_lea.vmem [#allocation1], 88
    %340 = vst [vmem:[%s339] sm:%s4] %v337
    %s341 = smul.addr 1, 10
    %s342 = scalar_lea.vmem %s0, %s341
    %s343 = sshrl.u32 %s4, 1
    %s344 = sor.u32 %s4, %s343
    %s345 = sand.u32 %s344, 85
    %s346 = sshrl.u32 %s345, 1
    %s347 = sor.u32 %s345, %s346
    %s348 = sand.u32 51, %s347
    %s349 = sshrl.u32 %s348, 2
    %s350 = sor.u32 %s348, %s349
    %s351 = sand.u32 15, %s350
    %v352 = vld [vmem:[%s342] sm:%s351]
    %v353 = vunpack.c.l.bf16 %v352
    %v354 = vunpack.c.h.bf16 %v352
    %s355 = scalar_lea.vmem [#allocation1], 80
    %356 = vst [vmem:[%s355] sm:%s4] %v353
    %s357 = smul.addr 1, 9
    %s358 = scalar_lea.vmem %s0, %s357
    %s359 = sshrl.u32 %s4, 1
    %s360 = sor.u32 %s4, %s359
    %s361 = sand.u32 %s360, 85
    %s362 = sshrl.u32 %s361, 1
    %s363 = sor.u32 %s361, %s362
    %s364 = sand.u32 51, %s363
    %s365 = sshrl.u32 %s364, 2
    %s366 = sor.u32 %s364, %s365
    %s367 = sand.u32 15, %s366
    %v368 = vld [vmem:[%s358] sm:%s367]
    %v369 = vunpack.c.l.bf16 %v368
    %v370 = vunpack.c.h.bf16 %v368
    %s371 = scalar_lea.vmem [#allocation1], 72
    %372 = vst [vmem:[%s371] sm:%s4] %v369
    %s373 = smul.addr 1, 8
    %s374 = scalar_lea.vmem %s0, %s373
    %s375 = sshrl.u32 %s4, 1
    %s376 = sor.u32 %s4, %s375
    %s377 = sand.u32 %s376, 85
    %s378 = sshrl.u32 %s377, 1
    %s379 = sor.u32 %s377, %s378
    %s380 = sand.u32 51, %s379
    %s381 = sshrl.u32 %s380, 2
    %s382 = sor.u32 %s380, %s381
    %s383 = sand.u32 15, %s382
    %v384 = vld [vmem:[%s374] sm:%s383]
    %v385 = vunpack.c.l.bf16 %v384
    %v386 = vunpack.c.h.bf16 %v384
    %s387 = scalar_lea.vmem [#allocation1], 64
    %388 = vst [vmem:[%s387] sm:%s4] %v385
    %s389 = smul.addr 1, 7
    %s390 = scalar_lea.vmem %s0, %s389
    %s391 = sshrl.u32 %s4, 1
    %s392 = sor.u32 %s4, %s391
    %s393 = sand.u32 %s392, 85
    %s394 = sshrl.u32 %s393, 1
    %s395 = sor.u32 %s393, %s394
    %s396 = sand.u32 51, %s395
    %s397 = sshrl.u32 %s396, 2
    %s398 = sor.u32 %s396, %s397
    %s399 = sand.u32 15, %s398
    %v400 = vld [vmem:[%s390] sm:%s399]
    %v401 = vunpack.c.l.bf16 %v400
    %v402 = vunpack.c.h.bf16 %v400
    %s403 = scalar_lea.vmem [#allocation1], 56
    %404 = vst [vmem:[%s403] sm:%s4] %v401
    %s405 = smul.addr 1, 6
    %s406 = scalar_lea.vmem %s0, %s405
    %s407 = sshrl.u32 %s4, 1
    %s408 = sor.u32 %s4, %s407
    %s409 = sand.u32 %s408, 85
    %s410 = sshrl.u32 %s409, 1
    %s411 = sor.u32 %s409, %s410
    %s412 = sand.u32 51, %s411
    %s413 = sshrl.u32 %s412, 2
    %s414 = sor.u32 %s412, %s413
    %s415 = sand.u32 15, %s414
    %v416 = vld [vmem:[%s406] sm:%s415]
    %v417 = vunpack.c.l.bf16 %v416
    %v418 = vunpack.c.h.bf16 %v416
    %s419 = scalar_lea.vmem [#allocation1], 48
    %420 = vst [vmem:[%s419] sm:%s4] %v417
    %s421 = smul.addr 1, 5
    %s422 = scalar_lea.vmem %s0, %s421
    %s423 = sshrl.u32 %s4, 1
    %s424 = sor.u32 %s4, %s423
    %s425 = sand.u32 %s424, 85
    %s426 = sshrl.u32 %s425, 1
    %s427 = sor.u32 %s425, %s426
    %s428 = sand.u32 51, %s427
    %s429 = sshrl.u32 %s428, 2
    %s430 = sor.u32 %s428, %s429
    %s431 = sand.u32 15, %s430
    %v432 = vld [vmem:[%s422] sm:%s431]
    %v433 = vunpack.c.l.bf16 %v432
    %v434 = vunpack.c.h.bf16 %v432
    %s435 = scalar_lea.vmem [#allocation1], 40
    %436 = vst [vmem:[%s435] sm:%s4] %v433
    %s437 = smul.addr 1, 4
    %s438 = scalar_lea.vmem %s0, %s437
    %s439 = sshrl.u32 %s4, 1
    %s440 = sor.u32 %s4, %s439
    %s441 = sand.u32 %s440, 85
    %s442 = sshrl.u32 %s441, 1
    %s443 = sor.u32 %s441, %s442
    %s444 = sand.u32 51, %s443
    %s445 = sshrl.u32 %s444, 2
    %s446 = sor.u32 %s444, %s445
    %s447 = sand.u32 15, %s446
    %v448 = vld [vmem:[%s438] sm:%s447]
    %v449 = vunpack.c.l.bf16 %v448
    %v450 = vunpack.c.h.bf16 %v448
    %s451 = scalar_lea.vmem [#allocation1], 32
    %452 = vst [vmem:[%s451] sm:%s4] %v449
    %s453 = smul.addr 1, 3
    %s454 = scalar_lea.vmem %s0, %s453
    %s455 = sshrl.u32 %s4, 1
    %s456 = sor.u32 %s4, %s455
    %s457 = sand.u32 %s456, 85
    %s458 = sshrl.u32 %s457, 1
    %s459 = sor.u32 %s457, %s458
    %s460 = sand.u32 51, %s459
    %s461 = sshrl.u32 %s460, 2
    %s462 = sor.u32 %s460, %s461
    %s463 = sand.u32 15, %s462
    %v464 = vld [vmem:[%s454] sm:%s463]
    %v465 = vunpack.c.l.bf16 %v464
    %v466 = vunpack.c.h.bf16 %v464
    %s467 = scalar_lea.vmem [#allocation1], 24
    %468 = vst [vmem:[%s467] sm:%s4] %v465
    %s469 = smul.addr 1, 2
    %s470 = scalar_lea.vmem %s0, %s469
    %s471 = sshrl.u32 %s4, 1
    %s472 = sor.u32 %s4, %s471
    %s473 = sand.u32 %s472, 85
    %s474 = sshrl.u32 %s473, 1
    %s475 = sor.u32 %s473, %s474
    %s476 = sand.u32 51, %s475
    %s477 = sshrl.u32 %s476, 2
    %s478 = sor.u32 %s476, %s477
    %s479 = sand.u32 15, %s478
    %v480 = vld [vmem:[%s470] sm:%s479]
    %v481 = vunpack.c.l.bf16 %v480
    %v482 = vunpack.c.h.bf16 %v480
    %s483 = scalar_lea.vmem [#allocation1], 16
    %484 = vst [vmem:[%s483] sm:%s4] %v481
    %s485 = scalar_lea.vmem %s0, 1
    %s486 = sshrl.u32 %s4, 1
    %s487 = sor.u32 %s4, %s486
    %s488 = sand.u32 %s487, 85
    %s489 = sshrl.u32 %s488, 1
    %s490 = sor.u32 %s488, %s489
    %s491 = sand.u32 51, %s490
    %s492 = sshrl.u32 %s491, 2
    %s493 = sor.u32 %s491, %s492
    %s494 = sand.u32 15, %s493
    %v495 = vld [vmem:[%s485] sm:%s494]
    %v496 = vunpack.c.l.bf16 %v495
    %v497 = vunpack.c.h.bf16 %v495
    %s498 = scalar_lea.vmem [#allocation1], 8
    %499 = vst [vmem:[%s498] sm:%s4] %v496
    %s500 = sshrl.u32 %s4, 1
    %s501 = sor.u32 %s4, %s500
    %s502 = sand.u32 %s501, 85
    %s503 = sshrl.u32 %s502, 1
    %s504 = sor.u32 %s502, %s503
    %s505 = sand.u32 51, %s504
    %s506 = sshrl.u32 %s505, 2
    %s507 = sor.u32 %s505, %s506
    %s508 = sand.u32 15, %s507
    %v509 = vld [vmem:[%s0] sm:%s508]
    %v510 = vunpack.c.l.bf16 %v509
    %v511 = vunpack.c.h.bf16 %v509
    %512 = vst [vmem:[#allocation1] sm:%s4] %v510
    %s513 = smov 3
    %v514 = vld [vmem:[#allocation1] ss:$16 sm:%s513]
    %s515 = smov 12
    %v516 = vld [vmem:[#allocation1] ss:$16 sm:%s515]
    %vm517 = vcmask 1043458
    %v518 = vsel %vm517, %v516, %v514
    %s519 = smov 48
    %v520 = vld [vmem:[#allocation1] ss:$16 sm:%s519]
    %vm521 = vcmask 1045508
    %v522 = vsel %vm521, %v520, %v518
    %s523 = smov 192
    %v524 = vld [vmem:[#allocation1] ss:$16 sm:%s523]
    %vm525 = vcmask 1047558
    %v526 = vsel %vm525, %v524, %v522
    %vm527 = vcmask 64512
    %528 = vst.msk [vmem:[#allocation0] sm:$0xff] %vm527, %v526
    %s529 = scalar_lea.vmem [#allocation1], 128
    %s530 = smov 3
    %v531 = vld [vmem:[%s529] ss:$16 sm:%s530]
    %s532 = scalar_lea.vmem [#allocation1], 128
    %s533 = smov 12
    %v534 = vld [vmem:[%s532] ss:$16 sm:%s533]
    %vm535 = vcmask 1043458
    %v536 = vsel %vm535, %v534, %v531
    %s537 = scalar_lea.vmem [#allocation1], 128
    %s538 = smov 48
    %v539 = vld [vmem:[%s537] ss:$16 sm:%s538]
    %vm540 = vcmask 1045508
    %v541 = vsel %vm540, %v539, %v536
    %s542 = scalar_lea.vmem [#allocation1], 128
    %s543 = smov 192
    %v544 = vld [vmem:[%s542] ss:$16 sm:%s543]
    %vm545 = vcmask 1047558
    %v546 = vsel %vm545, %v544, %v541
    %vm547 = vcmask 64512
    %s548 = scalar_lea.vmem [#allocation0], 8
    %549 = vst.msk [vmem:[%s548] sm:$0xff] %vm547, %v546
    %s550 = scalar_lea.vmem [#allocation1], 9
    %s551 = smov 3
    %v552 = vld [vmem:[%s550] ss:$16 sm:%s551]
    %s553 = scalar_lea.vmem [#allocation1], 9
    %s554 = smov 12
    %v555 = vld [vmem:[%s553] ss:$16 sm:%s554]
    %vm556 = vcmask 1043458
    %v557 = vsel %vm556, %v555, %v552
    %s558 = scalar_lea.vmem [#allocation1], 9
    %s559 = smov 48
    %v560 = vld [vmem:[%s558] ss:$16 sm:%s559]
    %vm561 = vcmask 1045508
    %v562 = vsel %vm561, %v560, %v557
    %s563 = scalar_lea.vmem [#allocation1], 9
    %s564 = smov 192
    %v565 = vld [vmem:[%s563] ss:$16 sm:%s564]
    %vm566 = vcmask 1047558
    %v567 = vsel %vm566, %v565, %v562
    %568 = vrot.lane.b32.xlu0 %v567, 24
    %v569 = vpop.permute.xlu0 %568
    %vm570 = vcmask 261312
    %571 = vst.msk [vmem:[#allocation0] sm:$0xff] %vm570, %v569
    %s572 = scalar_lea.vmem [#allocation1], 137
    %s573 = smov 3
    %v574 = vld [vmem:[%s572] ss:$16 sm:%s573]
    %s575 = scalar_lea.vmem [#allocation1], 137
    %s576 = smov 12
    %v577 = vld [vmem:[%s575] ss:$16 sm:%s576]
    %vm578 = vcmask 1043458
    %v579 = vsel %vm578, %v577, %v574
    %s580 = scalar_lea.vmem [#allocation1], 137
    %s581 = smov 48
    %v582 = vld [vmem:[%s580] ss:$16 sm:%s581]
    %vm583 = vcmask 1045508
    %v584 = vsel %vm583, %v582, %v579
    %s585 = scalar_lea.vmem [#allocation1], 137
    %s586 = smov 192
    %v587 = vld [vmem:[%s585] ss:$16 sm:%s586]
    %vm588 = vcmask 1047558
    %v589 = vsel %vm588, %v587, %v584
    %590 = vrot.lane.b32.xlu0 %v589, 24
    %v591 = vpop.permute.xlu0 %590
    %vm592 = vcmask 261312
    %s593 = scalar_lea.vmem [#allocation0], 8
    %594 = vst.msk [vmem:[%s593] sm:$0xff] %vm592, %v591
    %s595 = scalar_lea.vmem [#allocation1], 8
    %s596 = smov 3
    %v597 = vld [vmem:[%s595] ss:$16 sm:%s596]
    %s598 = scalar_lea.vmem [#allocation1], 8
    %s599 = smov 12
    %v600 = vld [vmem:[%s598] ss:$16 sm:%s599]
    %vm601 = vcmask 1043458
    %v602 = vsel %vm601, %v600, %v597
    %s603 = scalar_lea.vmem [#allocation1], 8
    %s604 = smov 48
    %v605 = vld [vmem:[%s603] ss:$16 sm:%s604]
    %vm606 = vcmask 1045508
    %v607 = vsel %vm606, %v605, %v602
    %s608 = scalar_lea.vmem [#allocation1], 8
    %s609 = smov 192
    %v610 = vld [vmem:[%s608] ss:$16 sm:%s609]
    %vm611 = vcmask 1047558
    %v612 = vsel %vm611, %v610, %v607
    %613 = vrot.lane.b32.xlu0 %v612, 16
    %v614 = vpop.permute.xlu0 %613
    %vm615 = vcmask 195712
    %616 = vst.msk [vmem:[#allocation0] sm:$0xff] %vm615, %v614
    %s617 = scalar_lea.vmem [#allocation1], 136
    %s618 = smov 3
    %v619 = vld [vmem:[%s617] ss:$16 sm:%s618]
    %s620 = scalar_lea.vmem [#allocation1], 136
    %s621 = smov 12
    %v622 = vld [vmem:[%s620] ss:$16 sm:%s621]
    %vm623 = vcmask 1043458
    %v624 = vsel %vm623, %v622, %v619
    %s625 = scalar_lea.vmem [#allocation1], 136
    %s626 = smov 48
    %v627 = vld [vmem:[%s625] ss:$16 sm:%s626]
    %vm628 = vcmask 1045508
    %v629 = vsel %vm628, %v627, %v624
    %s630 = scalar_lea.vmem [#allocation1], 136
    %s631 = smov 192
    %v632 = vld [vmem:[%s630] ss:$16 sm:%s631]
    %vm633 = vcmask 1047558
    %v634 = vsel %vm633, %v632, %v629
    %635 = vrot.lane.b32.xlu0 %v634, 16
    %v636 = vpop.permute.xlu0 %635
    %vm637 = vcmask 195712
    %s638 = scalar_lea.vmem [#allocation0], 8
    %639 = vst.msk [vmem:[%s638] sm:$0xff] %vm637, %v636
    %s640 = scalar_lea.vmem [#allocation1], 1
    %s641 = smov 3
    %v642 = vld [vmem:[%s640] ss:$16 sm:%s641]
    %s643 = scalar_lea.vmem [#allocation1], 1
    %s644 = smov 12
    %v645 = vld [vmem:[%s643] ss:$16 sm:%s644]
    %vm646 = vcmask 1043458
    %v647 = vsel %vm646, %v645, %v642
    %s648 = scalar_lea.vmem [#allocation1], 1
    %s649 = smov 48
    %v650 = vld [vmem:[%s648] ss:$16 sm:%s649]
    %vm651 = vcmask 1045508
    %v652 = vsel %vm651, %v650, %v647
    %s653 = scalar_lea.vmem [#allocation1], 1
    %s654 = smov 192
    %v655 = vld [vmem:[%s653] ss:$16 sm:%s654]
    %vm656 = vcmask 1047558
    %v657 = vsel %vm656, %v655, %v652
    %658 = vrot.lane.b32.xlu0 %v657, 8
    %v659 = vpop.permute.xlu0 %658
    %vm660 = vcmask 130112
    %661 = vst.msk [vmem:[#allocation0] sm:$0xff] %vm660, %v659
    %s662 = scalar_lea.vmem [#allocation1], 129
    %s663 = smov 3
    %v664 = vld [vmem:[%s662] ss:$16 sm:%s663]
    %s665 = scalar_lea.vmem [#allocation1], 129
    %s666 = smov 12
    %v667 = vld [vmem:[%s665] ss:$16 sm:%s666]
    %vm668 = vcmask 1043458
    %v669 = vsel %vm668, %v667, %v664
    %s670 = scalar_lea.vmem [#allocation1], 129
    %s671 = smov 48
    %v672 = vld [vmem:[%s670] ss:$16 sm:%s671]
    %vm673 = vcmask 1045508
    %v674 = vsel %vm673, %v672, %v669
    %s675 = scalar_lea.vmem [#allocation1], 129
    %s676 = smov 192
    %v677 = vld [vmem:[%s675] ss:$16 sm:%s676]
    %vm678 = vcmask 1047558
    %v679 = vsel %vm678, %v677, %v674
    %680 = vrot.lane.b32.xlu0 %v679, 8
    %v681 = vpop.permute.xlu0 %680
    %vm682 = vcmask 130112
    %s683 = scalar_lea.vmem [#allocation0], 8
    %684 = vst.msk [vmem:[%s683] sm:$0xff] %vm682, %v681
    %s686 = smul.u32 4, 2
    %s687 = sshllo.u32 0, %s686
    %s688 = sshrl.u32 %s686, 1
    %v689 = vld [vmem:[#allocation0] sm:%s687]
    %v690 = vpack.c.bf16 0.0, %v689
    %s691 = sshllo.u32 0, %s688
    %692 = vst [vmem:[%s1] sm:%s691] %v690
    %s693 = scalar_lea.vmem [#allocation0], 8
    %v694 = vld [vmem:[%s693] sm:%s687]
    %v695 = vpack.c.bf16 0.0, %v694
    %s696 = sshllo.u32 0, %s688
    %s697 = scalar_lea.vmem %s1, 4
    %698 = vst [vmem:[%s697] sm:%s696] %v695

// kernel: down_forward.1
$region0: #{down_forward.1}
  #allocation0 [shape = 'u32[]', space=smem, size = 0x4, offset = 0x4, fixed_abs, tag = 'smem constant byte address 0x4 - core index']
  #allocation1 [shape = 'u32[144,128]{1,0:T(1,128)}', space=vmem, size = 0x12000, scoped, tag = 'internal scratch']
  #allocation2 [shape = 'bf16[5,8,64]{2,1,0:T(8,128)(2,1)}', space=vmem, size = 0x2800, scoped, tag = 'scratch operand']
  %s0 = inlined_call_operand.vmem [shape: bf16[2,9,9,32], index: 0, kind: input, shape index: {}, may-alias: {0,1}]
  %s1 = inlined_call_operand.vmem [shape: bf16[2,9,9,32], index: 1, kind: input, shape index: {}, may-alias: {0,1}]
  %s2 = inlined_call_operand.vmem [shape: bf16[2,64,16], index: 2, kind: input, shape index: {}]
  %s3 = inlined_call_operand.hbm [shape: f32[2,8,8,16], index: 3, kind: output, shape index: {}]
  %s4 = sld [smem:[#allocation0]]
  $region45: #{down_forward.1} parent=0
    _
  %s6 = ssub.s32 1, %s4
  %s7 = scalar_select 0, %s6, %s4
  $region1: #{down_forward.1} parent=0
    #allocation3 [shape = 'u8[32768]{0}', space=vmem, size = 0x8000, scoped, tag = 'output window, operand 0']
    #allocation4 [shape = 's32[2]{0}', space=sflag, size = 0x8, scoped, tag = 'scoped memory for down_forward.1']
    %8 = vsyncpa [#allocation4], 0
    %s9 = scalar_lea.sflag [#allocation4], 1
    %10 = vsyncpa %s9, 0
    loop: start=0, step=1, limit=6
    $region2: #{down_forward.1} parent=1 // loop_pre_header
      _
    $region3: #{down_forward.1} parent=1 // loop_header
      %s12 = sphi 0, %s16
      %p13 = scmp.ge.s32.totalorder %s12, 6
      %s19 = sphi 0, %s31
      %s20 = sphi 0, %s27
      %s21 = sphi 0, %s19
      %s22 = sphi 0, %s20
      %s23 = sphi 0, %s21
      %s24 = sphi 0, %s22
      %s36 = sphi 0, %s38
      %s39 = sphi 0, %s36
      %s40 = sphi 0, %s39
      %s56 = sphi 0, %s40
      %s68 = sphi 0, %s70
      %s71 = sphi 0, %s68
      %s72 = sphi 0, %s71
      %s88 = sphi 0, %s72
      %s92 = sphi 0, %s92
      %s94 = sphi 0, %s92
      %s95 = sphi 0, %s94
      %s109 = sphi 0, %s95
      %s117 = sphi 0, %s119
      %s120 = sphi 0, %s117
      %s121 = sphi 0, %s120
      %s137 = sphi 0, %s121
    $region4: #{down_forward.1} parent=1 // loop_header_branch
      %15 = sbr.rel (%p13) target = $region8
    $region5: #{down_forward.1} parent=1 // loop_body
      %s17 = ssub.s32 %s12, 1
      %s18 = ssub.s32 %s12, 2
      %s25 = sadd.s32 1, %s20
      %p26 = scmp.ge.s32.totalorder %s25, 2
      %s27 = scalar_select %p26, 0, %s25
      %s28 = sadd.s32 1, %s19
      %s29 = scalar_select %p26, %s28, %s19
      %p30 = scmp.ge.s32.totalorder %s29, 2
      %s31 = scalar_select %p30, 0, %s29
      %s32 = ssub.s32 %s19, %s31
      %s33 = ssub.s32 %s20, %s27
      %s34 = sor.u32 %s32, %s33
      %p35 = scmp.eq.s32.totalorder %s34, 0
      %s37 = sadd.s32 %s36, 1
      %s38 = scalar_select %p35, %s36, %s37
      %p41 = pneg %p35
      %p42 = scmp.eq.s32.totalorder %s12, 3
      %p43 = por %p41, %p42
      %p44 = scmp.ne.s32.totalorder %s36, %s39
      %p45 = scmp.eq.s32.totalorder %s12, 0
      %p46 = por %p44, %p45
      %p47 = scmp.ne.s32.totalorder %s36, %s39
      %p48 = scmp.eq.s32.totalorder %s17, 3
      %p49 = por %p47, %p48
      %p50 = scmp.ne.s32.totalorder %s39, %s40
      %p51 = scmp.eq.s32.totalorder %s17, 0
      %p52 = por %p50, %p51
      %p53 = scmp.ne.s32.totalorder %s39, %s40
      %p54 = scmp.eq.s32.totalorder %s18, 3
      %p55 = por %p53, %p54
      %p57 = scmp.ne.s32.totalorder %s40, %s56
      %p58 = scmp.eq.s32.totalorder %s18, 0
      %p59 = por %p57, %p58
      %s60 = sadd.s32 %s20, 1
      %s61 = smul.u32 %s60, 4
      %s62 = sadd.s32 %s27, 1
      %s63 = smul.u32 %s62, 4
      %s64 = ssub.s32 %s19, %s31
      %s65 = ssub.s32 %s61, %s63
      %s66 = sor.u32 %s64, %s65
      %p67 = scmp.eq.s32.totalorder %s66, 0
      %s69 = sadd.s32 %s68, 1
      %s70 = scalar_select %p67, %s68, %s69
      %p73 = pneg %p67
      %p74 = scmp.eq.s32.totalorder %s12, 3
      %p75 = por %p73, %p74
      %p76 = scmp.ne.s32.totalorder %s68, %s71
      %p77 = scmp.eq.s32.totalorder %s12, 0
      %p78 = por %p76, %p77
      %p79 = scmp.ne.s32.totalorder %s68, %s71
      %p80 = scmp.eq.s32.totalorder %s17, 3
      %p81 = por %p79, %p80
      %p82 = scmp.ne.s32.totalorder %s71, %s72
      %p83 = scmp.eq.s32.totalorder %s17, 0
      %p84 = por %p82, %p83
      %p85 = scmp.ne.s32.totalorder %s71, %s72
      %p86 = scmp.eq.s32.totalorder %s18, 3
      %p87 = por %p85, %p86
      %p89 = scmp.ne.s32.totalorder %s72, %s88
      %p90 = scmp.eq.s32.totalorder %s18, 0
      %p91 = por %p89, %p90
      %s93 = sadd.s32 %s92, 1
      %p96 = scmp.eq.s32.totalorder %s12, 3
      %p97 = scmp.ne.s32.totalorder %s92, %s94
      %p98 = scmp.eq.s32.totalorder %s12, 0
      %p99 = por %p97, %p98
      %p100 = scmp.ne.s32.totalorder %s92, %s94
      %p101 = scmp.eq.s32.totalorder %s17, 3
      %p102 = por %p100, %p101
      %p103 = scmp.ne.s32.totalorder %s94, %s95
      %p104 = scmp.eq.s32.totalorder %s17, 0
      %p105 = por %p103, %p104
      %p106 = scmp.ne.s32.totalorder %s94, %s95
      %p107 = scmp.eq.s32.totalorder %s18, 3
      %p108 = por %p106, %p107
      %p110 = scmp.ne.s32.totalorder %s95, %s109
      %p111 = scmp.eq.s32.totalorder %s18, 0
      %p112 = por %p110, %p111
      %s113 = ssub.s32 %s19, %s31
      %s114 = ssub.s32 %s20, %s27
      %s115 = sor.u32 %s113, %s114
      %p116 = scmp.eq.s32.totalorder %s115, 0
      %s118 = sadd.s32 %s117, 1
      %s119 = scalar_select %p116, %s117, %s118
      %p122 = pneg %p116
      %p123 = scmp.eq.s32.totalorder %s12, 3
      %p124 = por %p122, %p123
      %p125 = scmp.ne.s32.totalorder %s117, %s120
      %p126 = scmp.eq.s32.totalorder %s12, 0
      %p127 = por %p125, %p126
      %p128 = scmp.ne.s32.totalorder %s117, %s120
      %p129 = scmp.eq.s32.totalorder %s17, 3
      %p130 = por %p128, %p129
      %p131 = scmp.ne.s32.totalorder %s120, %s121
      %p132 = scmp.eq.s32.totalorder %s17, 0
      %p133 = por %p131, %p132
      %p134 = scmp.ne.s32.totalorder %s120, %s121
      %p135 = scmp.eq.s32.totalorder %s18, 3
      %p136 = por %p134, %p135
      %p138 = scmp.ne.s32.totalorder %s121, %s137
      %p139 = scmp.eq.s32.totalorder %s18, 0
      %p140 = por %p138, %p139
      %p141 = scmp.le.s32.totalorder 1, %s12
      %p142 = scmp.lt.s32.totalorder %s12, 5
      %p143 = pnand %p141, %p142
      %p144 = pneg %p143
      // Predicated region
      $region9: #{down_forward.1} parent=5 // pred_check
        _
      $region10: #{down_forward.1} parent=5 // pred_check_branch
        %146 = sbr.rel (%p143) target = $region12
      $region11: #{down_forward.1} parent=5 // pred_region
        %s147 = ssub.s32 %s12, 1
        // Predicated region
        $region13: #{down_forward.1} parent=11 // pred_check
          %p148 = pneg %p105
        $region14: #{down_forward.1} parent=11 // pred_check_branch
          %150 = sbr.rel (%p148) target = $region16
        $region15: #{down_forward.1} parent=11 // pred_region
          _
        $region16: #{down_forward.1} parent=11 // pred_fallthru
          _
      $region12: #{down_forward.1} parent=5 // pred_fallthru
        _
      %p151 = scmp.lt.s32.totalorder %s12, 4
      // Predicated region
      $region17: #{down_forward.1} parent=5 // pred_check
        %p152 = pneg %p151
      $region18: #{down_forward.1} parent=5 // pred_check_branch
        %154 = sbr.rel (%p152) target = $region20
      $region19: #{down_forward.1} parent=5 // pred_region
        // Predicated region
        $region21: #{down_forward.1} parent=19 // pred_check
          %p155 = pneg %p46
        $region22: #{down_forward.1} parent=19 // pred_check_branch
          %157 = sbr.rel (%p155) target = $region24
        $region23: #{down_forward.1} parent=19 // pred_region
          %s158 = smul.u32 4, %s20
          %s159 = ssub.s32 9, %s158
          %p160 = scmp.lt.s32.totalorder %s159, 4
          %s161 = scalar_select %p160, %s159, 4
          %s162 = smul.u32 64, %s161
          %s163 = smul.u32 %s162, 2
          %p164 = scmp.lt.s32.totalorder %s19, 1
          %s165 = scalar_select %p164, %s19, 1
          %p166 = scmp.lt.s32.totalorder %s158, 8
          %s167 = scalar_select %p166, %s158, 8
          %s168 = smul.addr %s167, 2
          %s169 = smul.addr %s165, 18
          %s170 = sadd.s32 %s168, %s169
          %s171 = smul.addr %s170, 4
          %s172 = scalar_lea.vmem %s0, %s171
          %s173 = smul.u32 4, %s20
          %s174 = ssub.s32 9, %s173
          %p175 = scmp.lt.s32.totalorder %s174, 4
          %s176 = scalar_select %p175, %s174, 4
          %s177 = smul.u32 64, %s176
          %s178 = smul.u32 %s177, 2
        $region24: #{down_forward.1} parent=19 // pred_fallthru
          _
        // Predicated region
        $region25: #{down_forward.1} parent=19 // pred_check
          %p179 = pneg %p78
        $region26: #{down_forward.1} parent=19 // pred_check_branch
          %181 = sbr.rel (%p179) target = $region28
        $region27: #{down_forward.1} parent=19 // pred_region
          %s182 = sadd.s32 %s20, 1
          %s183 = smul.u32 %s182, 4
          %p184 = scmp.lt.s32.totalorder %s19, 1
          %s185 = scalar_select %p184, %s19, 1
          %p186 = scmp.lt.s32.totalorder %s183, 8
          %s187 = scalar_select %p186, %s183, 8
          %s188 = smul.addr %s187, 2
          %s189 = smul.addr %s185, 18
          %s190 = sadd.s32 %s188, %s189
          %s191 = smul.addr %s190, 4
          %s192 = scalar_lea.vmem %s1, %s191
          %s193 = sadd.s32 %s20, 1
          %s194 = smul.u32 %s193, 4
        $region28: #{down_forward.1} parent=19 // pred_fallthru
          _
      $region20: #{down_forward.1} parent=5 // pred_fallthru
        _
      %p195 = scmp.le.s32.totalorder 1, %s12
      %p196 = scmp.lt.s32.totalorder %s12, 5
      %p197 = pnand %p195, %p196
      %p198 = pneg %p197
      // Predicated region
      $region29: #{down_forward.1} parent=5 // pred_check
        _
      $region30: #{down_forward.1} parent=5 // pred_check_branch
        %200 = sbr.rel (%p197) target = $region32
      $region31: #{down_forward.1} parent=5 // pred_region
        %s201 = ssub.s32 %s12, 1
        %s202 = smul.u32 4, %s22
        %s203 = ssub.s32 9, %s202
        %p204 = scmp.lt.s32.totalorder %s203, 4
        %s205 = scalar_select %p204, %s203, 4
        %s206 = smul.u32 64, %s205
        %s207 = smul.u32 %s206, 2
        %p208 = scmp.lt.s32.totalorder %s21, 1
        %s209 = scalar_select %p208, %s21, 1
        %p210 = scmp.lt.s32.totalorder %s202, 8
        %s211 = scalar_select %p210, %s202, 8
        %s212 = smul.addr %s211, 2
        %s213 = smul.addr %s209, 18
        %s214 = sadd.s32 %s212, %s213
        %s215 = smul.addr %s214, 4
        %s216 = scalar_lea.vmem %s0, %s215
        %p217 = pneg %p52
        %p218 = pneg %p49
        %s219 = sadd.s32 %s22, 1
        %s220 = smul.u32 %s219, 4
        %p221 = scmp.lt.s32.totalorder %s21, 1
        %s222 = scalar_select %p221, %s21, 1
        %p223 = scmp.lt.s32.totalorder %s220, 8
        %s224 = scalar_select %p223, %s220, 8
        %s225 = smul.addr %s224, 2
        %s226 = smul.addr %s222, 18
        %s227 = sadd.s32 %s225, %s226
        %s228 = smul.addr %s227, 4
        %s229 = scalar_lea.vmem %s1, %s228
        %p230 = pneg %p84
        %p231 = pneg %p81
        %p232 = pneg %p105
        %p233 = pneg %p102
        %p234 = pneg %p133
        %p235 = pneg %p130
        %s236 = sand.u32 %s120, 1
        %s237 = scalar_lea.sflag [#allocation4], %s236
        %s238 = sand.u32 %s120, 1
        %s239 = smul.addr %s238, 32
        %s240 = scalar_lea.vmem [#allocation3], %s239
        %s241 = smul.u32 4, %s22
        %s242 = ssub.s32 9, %s241
        %p243 = scmp.lt.s32.totalorder %s242, 4
        %s244 = scalar_select %p243, %s242, 4
        %s245 = smul.u32 64, %s244
        %s246 = smul.u32 %s245, 2
        %p247 = scmp.lt.s32.totalorder %s21, 1
        %s248 = scalar_select %p247, %s21, 1
        %p249 = scmp.lt.s32.totalorder %s241, 8
        %s250 = scalar_select %p249, %s241, 8
        %s251 = smul.addr %s250, 2
        %s252 = smul.addr %s248, 18
        %s253 = sadd.s32 %s251, %s252
        %s254 = smul.addr %s253, 4
        %s255 = scalar_lea.vmem %s0, %s254
        %s256 = smul.u32 4, %s22
        %s257 = ssub.s32 9, %s256
        %p258 = scmp.lt.s32.totalorder %s257, 4
        %s259 = scalar_select %p258, %s257, 4
        %s260 = smul.u32 64, %s259
        %s261 = smul.u32 %s260, 2
        %s262 = sadd.s32 %s22, 1
        %s263 = smul.u32 %s262, 4
        %p264 = scmp.lt.s32.totalorder %s21, 1
        %s265 = scalar_select %p264, %s21, 1
        %p266 = scmp.lt.s32.totalorder %s263, 8
        %s267 = scalar_select %p266, %s263, 8
        %s268 = smul.addr %s267, 2
        %s269 = smul.addr %s265, 18
        %s270 = sadd.s32 %s268, %s269
        %s271 = smul.addr %s270, 4
        %s272 = scalar_lea.vmem %s1, %s271
        %s273 = sadd.s32 %s22, 1
        %s274 = smul.u32 %s273, 4
        %s275 = smul.u32 4, %s22
        %v277 = vld [vmem:[%s255] sm:$0xf]
        %v278 = vld [vmem:[%s255 + $0x8] sm:$0xf]
        %v279 = vld [vmem:[%s255 + $0x10] sm:$0xf]
        %v280 = vld [vmem:[%s255 + $0x18] sm:$0xf]
        %vm281 = vcmask 257024
        %282 = vst.msk [vmem:[#allocation2] sm:$0xf] %vm281, %v277
        %283 = vst.msk [vmem:[#allocation2 + $0x4] sm:$0xf] %vm281, %v278
        %284 = vst.msk [vmem:[#allocation2 + $0x8] sm:$0xf] %vm281, %v279
        %285 = vst.msk [vmem:[#allocation2 + $0xc] sm:$0xf] %vm281, %v280
        %v286 = vld [vmem:[%s255] sm:$0xf]
        %v287 = vld [vmem:[%s255 + $0x4] sm:$0x1]
        %v288 = vld [vmem:[%s255 + $0x8] sm:$0xf]
        %v289 = vld [vmem:[%s255 + $0xc] sm:$0x1]
        %v290 = vld [vmem:[%s255 + $0x10] sm:$0xf]
        %v291 = vld [vmem:[%s255 + $0x14] sm:$0x1]
        %v292 = vld [vmem:[%s255 + $0x18] sm:$0xf]
        %v293 = vld [vmem:[%s255 + $0x1c] sm:$0x1]
        %vm294 = vsmask.f32 3328
        %vm295 = vsmask.f32 7440
        %vm296 = vmor %vm294, %vm295
        %v298 = vshrl.u32 %v286, 16
        %v300 = vrot.slane %v298, 4
        %v301 = vshll.u32 %v286, 16
        %v303 = vrot.slane %v301, 5
        %v304 = vor.u32 %v300, %v303
        %v305 = vrot.slane %v304, 4
        %v307 = vshll.u32 %v287, 16
        %v309 = vrot.slane %v307, 5
        %v310 = vsel %vm296, %v305, %v309
        %v312 = vshrl.u32 %v288, 16
        %v314 = vrot.slane %v312, 4
        %v315 = vshll.u32 %v288, 16
        %v317 = vrot.slane %v315, 5
        %v318 = vor.u32 %v314, %v317
        %v319 = vrot.slane %v318, 4
        %v321 = vshll.u32 %v289, 16
        %v323 = vrot.slane %v321, 5
        %v324 = vsel %vm296, %v319, %v323
        %v326 = vshrl.u32 %v290, 16
        %v328 = vrot.slane %v326, 4
        %v329 = vshll.u32 %v290, 16
        %v331 = vrot.slane %v329, 5
        %v332 = vor.u32 %v328, %v331
        %v333 = vrot.slane %v332, 4
        %v335 = vshll.u32 %v291, 16
        %v337 = vrot.slane %v335, 5
        %v338 = vsel %vm296, %v333, %v337
        %v340 = vshrl.u32 %v292, 16
        %v342 = vrot.slane %v340, 4
        %v343 = vshll.u32 %v292, 16
        %v345 = vrot.slane %v343, 5
        %v346 = vor.u32 %v342, %v345
        %v347 = vrot.slane %v346, 4
        %v349 = vshll.u32 %v293, 16
        %v351 = vrot.slane %v349, 5
        %v352 = vsel %vm296, %v347, %v351
        %353 = vrot.lane.b32.xlu0 %v310, 32
        %v354 = vpop.permute.xlu0 %353
        %355 = vrot.lane.b32.xlu0 %v324, 32
        %v356 = vpop.permute.xlu0 %355
        %357 = vrot.lane.b32.xlu0 %v338, 32
        %v358 = vpop.permute.xlu0 %357
        %359 = vrot.lane.b32.xlu0 %v352, 32
        %v360 = vpop.permute.xlu0 %359
        %vm365 = vcmask 519424
        %366 = vst.msk [vmem:[#allocation2] sm:$0xf] %vm365, %v354
        %367 = vst.msk [vmem:[#allocation2 + $0x4] sm:$0xf] %vm365, %v356
        %368 = vst.msk [vmem:[#allocation2 + $0x8] sm:$0xf] %vm365, %v358
        %369 = vst.msk [vmem:[#allocation2 + $0xc] sm:$0xf] %vm365, %v360
        %v370 = vld [vmem:[%s272] sm:$0xf]
        %s371 = scalar_lea.vmem [#allocation2], 16
        %372 = vst.msk [vmem:[%s371] sm:$0xf] %vm281, %v370
        %v373 = vld [vmem:[%s272] sm:$0xf]
        %v374 = vld [vmem:[%s272 + $0x4] sm:$0x1]
        %v376 = vshrl.u32 %v373, 16
        %v378 = vrot.slane %v376, 4
        %v379 = vshll.u32 %v373, 16
        %v381 = vrot.slane %v379, 5
        %v382 = vor.u32 %v378, %v381
        %v383 = vrot.slane %v382, 4
        %v385 = vshll.u32 %v374, 16
        %v387 = vrot.slane %v385, 5
        %v388 = vsel %vm296, %v383, %v387
        %389 = vrot.lane.b32.xlu0 %v388, 32
        %v390 = vpop.permute.xlu0 %389
        %392 = vst.msk [vmem:[%s371] sm:$0xf] %vm365, %v390
        %v393 = vld [vmem:[#allocation2] sm:$0xf]
        %v394 = vld [vmem:[#allocation2 + $0x4] sm:$0xf]
        %v395 = vld [vmem:[#allocation2 + $0x8] sm:$0xf]
        %v396 = vld [vmem:[#allocation2 + $0xc] sm:$0xf]
        %s397 = scalar_lea.vmem [#allocation2], 4
        %v398 = vld [vmem:[%s397] sm:$0xf]
        %v399 = vld [vmem:[%s397 + $0x4] sm:$0xf]
        %v400 = vld [vmem:[%s397 + $0x8] sm:$0xf]
        %v401 = vld [vmem:[%s397 + $0xc] sm:$0xf]
        %v402 = vld [vmem:[%s2] sm:$0xf]
        %v403 = vld [vmem:[%s2 + $0x4] sm:$0xf]
        %v404 = vld [vmem:[%s2 + $0x8] sm:$0xf]
        %v405 = vld [vmem:[%s2 + $0xc] sm:$0xf]
        %v406 = vld [vmem:[%s2 + $0x10] sm:$0xf]
        %v407 = vld [vmem:[%s2 + $0x14] sm:$0xf]
        %v408 = vld [vmem:[%s2 + $0x18] sm:$0xf]
        %v409 = vld [vmem:[%s2 + $0x1c] sm:$0xf]
        %s410 = scalar_lea.vmem %s2, 32
        %v411 = vld [vmem:[%s410] sm:$0xf]
        %v412 = vld [vmem:[%s410 + $0x4] sm:$0xf]
        %v413 = vld [vmem:[%s410 + $0x8] sm:$0xf]
        %v414 = vld [vmem:[%s410 + $0xc] sm:$0xf]
        %v415 = vld [vmem:[%s410 + $0x10] sm:$0xf]
        %v416 = vld [vmem:[%s410 + $0x14] sm:$0xf]
        %v417 = vld [vmem:[%s410 + $0x18] sm:$0xf]
        %v418 = vld [vmem:[%s410 + $0x1c] sm:$0xf]
        %v423 = vunpack.c.l.b16 %v398
        %v424 = vunpack.c.l.b16 %v399
        %v425 = vunpack.c.l.b16 %v400
        %v426 = vunpack.c.l.b16 %v401
        %v427 = vpack.c.b16 %v424, %v423
        %v428 = vpack.c.b16 %v426, %v425
        %v437 = vunpack.c.l.b16 %v411
        %v438 = vunpack.c.l.b16 %v412
        %v439 = vunpack.c.l.b16 %v413
        %v440 = vunpack.c.l.b16 %v414
        %v441 = vunpack.c.l.b16 %v415
        %v442 = vunpack.c.l.b16 %v416
        %v443 = vunpack.c.l.b16 %v417
        %v444 = vunpack.c.l.b16 %v418
        %v445 = vpack.c.b16 %v438, %v437
        %v446 = vpack.c.b16 %v440, %v439
        %v447 = vpack.c.b16 %v442, %v441
        %v448 = vpack.c.b16 %v444, %v443
        %vm453 = vcmask 523264
        %v455 = vsel %vm453, %v427, 0
        %v458 = vsel %vm453, %v428, 0
        %460 = vmatprep.subr.bf16.mxu0 0
        %461 = vmatpush1.bf16.msra.mxu0 %v445
        %462 = vmatprep.subr.bf16.mxu0 0
        %463 = vmatpush1.bf16.msra.mxu0 %v446
        %464 = vmatprep.subr.bf16.mxu0 0
        %465 = vmatpush1.bf16.msra.mxu0 %v447
        %466 = vmatprep.subr.bf16.mxu0 0
        %467 = vmatpush1.bf16.msra.mxu0 %v448
        %468 = vmatprep.subr.bf16.mxu0 0
        %469 = vmatpush1.bf16.msra.mxu0 0
        %470 = vmatprep.subr.bf16.mxu0 0
        %471 = vmatpush1.bf16.msra.mxu0 0
        %472 = vmatprep.subr.bf16.mxu0 0
        %473 = vmatpush1.bf16.msra.mxu0 0
        %474 = vmatprep.subr.bf16.mxu0 0
        %475 = vmatpush1.bf16.msra.mxu0 0
        %476 = vmatprep.subr.bf16.mxu0 0
        %477 = vmatpush1.bf16.msra.mxu0 0
        %478 = vmatprep.subr.bf16.mxu0 0
        %479 = vmatpush1.bf16.msra.mxu0 0
        %480 = vmatprep.subr.bf16.mxu0 0
        %481 = vmatpush1.bf16.msra.mxu0 0
        %482 = vmatprep.subr.bf16.mxu0 0
        %483 = vmatpush1.bf16.msra.mxu0 0
        %484 = vmatprep.subr.bf16.mxu0 0
        %485 = vmatpush1.bf16.msra.mxu0 0
        %486 = vmatprep.subr.bf16.mxu0 0
        %487 = vmatpush1.bf16.msra.mxu0 0
        %488 = vmatprep.subr.bf16.mxu0 0
        %489 = vmatpush1.bf16.msra.mxu0 0
        %490 = vmatprep.subr.bf16.mxu0 0
        %491 = vmatpush1.bf16.msra.mxu0 0
        %492 = vmatprep.mubr.bf16.mxu0 0
        %493 = vmatmul.mubr.bf16.gmra.mrb[0].mxu0 %v455
        %v494 = vpop.f32.mrb[0].mxu0
        %v495 = vadd.f32 0.0, %v494
        %v496 = vpop.f32.mrb[0].mxu0
        %v497 = vpop.f32.mrb[0].mxu0
        %v498 = vadd.f32 0.0, %v497
        %v499 = vpop.f32.mrb[0].mxu0
        %500 = vmatprep.mubr.bf16.mxu0 0
        %501 = vmatmul.mubr.bf16.gmra.mrb[0].mxu0 %v458
        %v502 = vpop.f32.mrb[0].mxu0
        %v503 = vadd.f32 0.0, %v502
        %v504 = vpop.f32.mrb[0].mxu0
        %v505 = vpop.f32.mrb[0].mxu0
        %v506 = vadd.f32 0.0, %v505
        %v507 = vpop.f32.mrb[0].mxu0
        %508 = vdwg.mxu0
        %v513 = vunpack.c.l.b16 %v393
        %v514 = vunpack.c.l.b16 %v394
        %v515 = vunpack.c.l.b16 %v395
        %v516 = vunpack.c.l.b16 %v396
        %v517 = vpack.c.b16 %v514, %v513
        %v518 = vpack.c.b16 %v516, %v515
        %v527 = vunpack.c.l.b16 %v402
        %v528 = vunpack.c.l.b16 %v403
        %v529 = vunpack.c.l.b16 %v404
        %v530 = vunpack.c.l.b16 %v405
        %v531 = vunpack.c.l.b16 %v406
        %v532 = vunpack.c.l.b16 %v407
        %v533 = vunpack.c.l.b16 %v408
        %v534 = vunpack.c.l.b16 %v409
        %v535 = vpack.c.b16 %v528, %v527
        %v536 = vpack.c.b16 %v530, %v529
        %v537 = vpack.c.b16 %v532, %v531
        %v538 = vpack.c.b16 %v534, %v533
        %v544 = vsel %vm453, %v517, 0
        %v547 = vsel %vm453, %v518, 0
        %549 = vmatprep.subr.bf16.mxu0 0
        %550 = vmatpush1.bf16.msra.mxu0 %v535
        %551 = vmatprep.subr.bf16.mxu0 0
        %552 = vmatpush1.bf16.msra.mxu0 %v536
        %553 = vmatprep.subr.bf16.mxu0 0
        %554 = vmatpush1.bf16.msra.mxu0 %v537
        %555 = vmatprep.subr.bf16.mxu0 0
        %556 = vmatpush1.bf16.msra.mxu0 %v538
        %557 = vmatprep.subr.bf16.mxu0 0
        %558 = vmatpush1.bf16.msra.mxu0 0
        %559 = vmatprep.subr.bf16.mxu0 0
        %560 = vmatpush1.bf16.msra.mxu0 0
        %561 = vmatprep.subr.bf16.mxu0 0
        %562 = vmatpush1.bf16.msra.mxu0 0
        %563 = vmatprep.subr.bf16.mxu0 0
        %564 = vmatpush1.bf16.msra.mxu0 0
        %565 = vmatprep.subr.bf16.mxu0 0
        %566 = vmatpush1.bf16.msra.mxu0 0
        %567 = vmatprep.subr.bf16.mxu0 0
        %568 = vmatpush1.bf16.msra.mxu0 0
        %569 = vmatprep.subr.bf16.mxu0 0
        %570 = vmatpush1.bf16.msra.mxu0 0
        %571 = vmatprep.subr.bf16.mxu0 0
        %572 = vmatpush1.bf16.msra.mxu0 0
        %573 = vmatprep.subr.bf16.mxu0 0
        %574 = vmatpush1.bf16.msra.mxu0 0
        %575 = vmatprep.subr.bf16.mxu0 0
        %576 = vmatpush1.bf16.msra.mxu0 0
        %577 = vmatprep.subr.bf16.mxu0 0
        %578 = vmatpush1.bf16.msra.mxu0 0
        %579 = vmatprep.subr.bf16.mxu0 0
        %580 = vmatpush1.bf16.msra.mxu0 0
        %581 = vmatprep.mubr.bf16.mxu0 0
        %582 = vmatmul.mubr.bf16.gmra.mrb[0].mxu0 %v544
        %v583 = vpop.f32.mrb[0].mxu0
        %v584 = vadd.f32 %v495, %v583
        %v585 = vpop.f32.mrb[0].mxu0
        %v586 = vpop.f32.mrb[0].mxu0
        %v587 = vadd.f32 %v498, %v586
        %v588 = vpop.f32.mrb[0].mxu0
        %589 = vmatprep.mubr.bf16.mxu0 0
        %590 = vmatmul.mubr.bf16.gmra.mrb[0].mxu0 %v547
        %v591 = vpop.f32.mrb[0].mxu0
        %v592 = vadd.f32 %v503, %v591
        %v593 = vpop.f32.mrb[0].mxu0
        %v594 = vpop.f32.mrb[0].mxu0
        %v595 = vadd.f32 %v506, %v594
        %v596 = vpop.f32.mrb[0].mxu0
        %597 = vdwg.mxu0
        %vm598 = vcmask 130048
        %599 = vst.msk [vmem:[%s240] sm:$0xff] %vm598, %v584
        %600 = vst.msk [vmem:[%s240 + $0x8] sm:$0xff] %vm598, %v587
        %601 = vst.msk [vmem:[%s240 + $0x10] sm:$0xff] %vm598, %v592
        %602 = vst.msk [vmem:[%s240 + $0x18] sm:$0xff] %vm598, %v595
        %s603 = sand.u32 %s120, 1
        %s604 = scalar_lea.sflag [#allocation4], %s603
        %s605 = sand.u32 %s120, 1
        %s606 = smul.addr %s605, 32
        %s607 = scalar_lea.vmem [#allocation3], %s606
        // Predicated region
        $region33: #{down_forward.1} parent=31 // pred_check
          %p608 = pneg %p130
        $region34: #{down_forward.1} parent=31 // pred_check_branch
          %610 = sbr.rel (%p608) target = $region36
        $region35: #{down_forward.1} parent=31 // pred_region
          %s611 = smul.u32 4, %s22
          %s613 = ssub.s32 512, 512
          %614 = vsyncadd %s604, %s613
          %s615 = smul.addr %s21, 8
          %s616 = sadd.s32 %s611, %s615
          %s617 = smul.addr %s616, 128
          %s618 = scalar_lea.hbm %s3, %s617
          %s619 = sshll.u32 %s607, 4
          %s620 = int_to_ptr.vmem [resolvable:$true] %s619
          %625 = dma.vmem_to_hbm [thread:$0]  %s620, 512, %s618, %s604, 128, 128, 8
        $region36: #{down_forward.1} parent=31 // pred_fallthru
          _
      $region32: #{down_forward.1} parent=5 // pred_fallthru
        _
      %p626 = scmp.le.s32.totalorder 2, %s12
      // Predicated region
      $region37: #{down_forward.1} parent=5 // pred_check
        %p627 = pneg %p626
      $region38: #{down_forward.1} parent=5 // pred_check_branch
        %629 = sbr.rel (%p627) target = $region40
      $region39: #{down_forward.1} parent=5 // pred_region
        %s630 = ssub.s32 %s12, 2
        // Predicated region
        $region41: #{down_forward.1} parent=39 // pred_check
          %p631 = pneg %p136
        $region42: #{down_forward.1} parent=39 // pred_check_branch
          %633 = sbr.rel (%p631) target = $region44
        $region43: #{down_forward.1} parent=39 // pred_region
          %s634 = sand.u32 %s121, 1
          %s635 = scalar_lea.sflag [#allocation4], %s634
          %s636 = sand.u32 %s121, 1
          %s637 = smul.addr %s636, 32
          %s638 = scalar_lea.vmem [#allocation3], %s637
          %639 = dma.done %s635, 512
        $region44: #{down_forward.1} parent=39 // pred_fallthru
          _
      $region40: #{down_forward.1} parent=5 // pred_fallthru
        _
    $region6: #{down_forward.1} parent=1 // loop_footer
      %s16 = sadd.s32 1, %s12
    $region7: #{down_forward.1} parent=1 // loop_footer_branch
      %11 = sbr.rel target = $region3
    $region8: #{down_forward.1} parent=1 // loop_exit
      _
    %640 = vsyncpa [#allocation4], 1
    %s641 = scalar_lea.sflag [#allocation4], 1
    %642 = vsyncpa %s641, 1

</llo_original>
